<compile_context>
chip_gen: v7x
topology: tpu7x:2x2x1
jax: 0.10.0
libtpu: 0.0.40
codegen_flags: <defaults>
</compile_context>

<pallas_src>
import jax
import jax.numpy as jnp
from jax import lax
from jax.experimental import pallas as pl
from jax.experimental.pallas import tpu as pltpu

FILTERS = (3, 4, 5)          # time-axis extent of each conv filter
F_MAX = max(FILTERS)
NF = len(FILTERS)
NEG_SLOPE = 0.1              # LeakyReLU slope
LANE = 128
TIME_CHUNK = 512             # max conv windows per inner step (caps activation VMEM)


def _round_up(x, m):
    return ((x + m - 1) // m) * m


def _make_kernel(TB, CH, n_chunks, D, NOC):
    """Kernel factory closing over static tiling constants."""

    def kernel(x_ref, w_ref, b_ref, lim_ref, wlin_ref, out_ref):
        # x_ref   : (TB, Lp, D)        bf16   (time already zero-padded in HBM)
        # w_ref   : (F_MAX, D, NOC)    bf16   (taps beyond a filter's extent are 0)
        # b_ref   : (1, NOC)           f32
        # lim_ref : (1, NOC)           int32  (valid window count per channel group)
        # wlin_ref: (NOC, OUT_PAD)     f32
        # out_ref : (TB, OUT_PAD)      f32
        lim = lim_ref[...]                                       # (1, NOC)
        t_base = lax.broadcasted_iota(jnp.int32, (CH, NOC), 0)   # hoisted out of loop

        def chunk(c, feat):
            t0 = c * CH
            acc = jnp.zeros((TB * CH, NOC), jnp.float32)
            # Per-tap matmuls: no im2col slab, no lane-axis concat.  CH % 8 == 0
            # so the leading-dim merge reshape is layout-free.
            for k in range(F_MAX):                               # static tap unroll
                xk = x_ref[:, pl.ds(t0 + k, CH), :].reshape(TB * CH, D)
                acc = acc + jnp.dot(xk, w_ref[k],
                                    preferred_element_type=jnp.float32)
            scores = acc.reshape(TB, CH, NOC)
            # Mask windows past each filter's valid range (they read zero padding).
            valid = (t_base + t0) < lim                          # (CH, NOC)
            scores = jnp.where(valid[None], scores, -jnp.inf)
            return jnp.maximum(feat, jnp.max(scores, axis=1))    # running time max

        feat0 = jnp.full((TB, NOC), -jnp.inf, jnp.float32)
        if n_chunks == 1:
            feat = chunk(0, feat0)
        else:
            feat = lax.fori_loop(0, n_chunks, chunk, feat0)

        # Deferred conv bias + ReLU (monotonic, commute with the time max).
        feat = jnp.maximum(feat + b_ref[...], 0.0)
        # Dropout is identity at inference.  Tiny f32 classifier head.
        logits = jnp.dot(feat, wlin_ref[...], preferred_element_type=jnp.float32)
        y = jnp.where(logits >= 0.0, logits, NEG_SLOPE * logits)  # LeakyReLU(0.1)
        out_ref[...] = jax.nn.sigmoid(y)                          # Sigmoid (EUP)

    return kernel


def cnn_classifier(x, conv_ws, conv_bs, w_lin):
    """x: (B, L, D); conv_ws[i]: (f_i, D, OC); conv_bs[i]: (1, OC);
    w_lin: (OC*NF, output_dim)."""
    B, L, D = x.shape
    OC = conv_ws[0].shape[-1]
    NOC = NF * OC
    out_dim = w_lin.shape[-1]
    out_pad = _round_up(out_dim, LANE)                 # lane-dense output store

    # Fuse all filters into one (F_MAX, D, NOC) tap-indexed weight (zero tail taps).
    w_cat = jnp.zeros((F_MAX, D, NOC), jnp.float32)
    for i, (w, f) in enumerate(zip(conv_ws, FILTERS)):
        w_cat = w_cat.at[:f, :, i * OC:(i + 1) * OC].set(w)
    b_cat = jnp.concatenate([b.reshape(1, OC) for b in conv_bs], axis=-1)
    limits = jnp.concatenate(
        [jnp.full((1, OC), L - f + 1, jnp.int32) for f in FILTERS], axis=-1)
    w_lin_p = jnp.zeros((NOC, out_pad), jnp.float32).at[:, :out_dim].set(w_lin)

    # Balanced time-chunk size, multiple of 8 (keeps the merge reshape layout-free).
    n0 = max(1, pl.cdiv(L, TIME_CHUNK))
    CH = _round_up(pl.cdiv(L, n0), 8)
    n_chunks = pl.cdiv(L, CH)
    Lp = n_chunks * CH + F_MAX - 1                     # wrapper-side zero time pad

    # Generation-aware VMEM budget (128 MiB on v5e/v6e, 64 MiB on v7x).
    try:
        info = pltpu.get_tpu_info()
        vmem_cap = int(getattr(info, "vmem_capacity_bytes", 64 * 1024 * 1024))
    except Exception:
        vmem_cap = 64 * 1024 * 1024
    vmem_limit = min(int(vmem_cap * 0.8), 100 * 1024 * 1024)
    budget = int(vmem_limit * 0.7)

    def est(tb, ch):
        x_bytes = 2 * tb * Lp * D * 2                  # double-buffered bf16 x tile
        tap = tb * ch * D * 4                          # one tap slice live (widened)
        act = 2 * tb * ch * NOC * 4                    # acc + masked scores
        wts = F_MAX * D * NOC * 2 + NOC * out_pad * 4 + 2 * NOC * 4
        return x_bytes + tap + act + wts + (1 << 20)

    if B <= 8:
        TB = B                                         # single tiny block
    else:
        tb_cap = min(64, _round_up(B, 8))
        # Guarantee >=2 grid blocks so both v7x TensorCores get work.
        tb_cap = min(tb_cap, max(8, _round_up(pl.cdiv(B, 2), 8)))
        TB = None
        while TB is None:
            for cand in range(tb_cap, 7, -8):
                if est(cand, CH) <= budget:
                    TB = cand
                    break
            if TB is None:
                if CH > 8:                             # shrink chunk before batch tile
                    CH = max(8, CH // 2)
                    n_chunks = pl.cdiv(L, CH)
                    Lp = n_chunks * CH + F_MAX - 1
                else:
                    TB = 8
                    break
    B_pad = _round_up(B, TB)
    grid = (B_pad // TB,)

    # bf16 conv operands (f32 accumulation); batch + time zero-padded once in HBM.
    xb = x.astype(jnp.bfloat16)
    xb = jnp.pad(xb, ((0, B_pad - B), (0, Lp - L), (0, 0)))
    w_cat_b = w_cat.astype(jnp.bfloat16)

    kernel = _make_kernel(TB, CH, n_chunks, D, NOC)

    out = pl.pallas_call(
        kernel,
        out_shape=jax.ShapeDtypeStruct((B_pad, out_pad), jnp.float32),
        grid=grid,
        in_specs=[
            pl.BlockSpec((TB, Lp, D), lambda i: (i, 0, 0)),        # batch-tiled, pipelined
            pl.BlockSpec((F_MAX, D, NOC), lambda i: (0, 0, 0)),    # weights: constant maps
            pl.BlockSpec((1, NOC), lambda i: (0, 0)),              #   -> DMA'd once,
            pl.BlockSpec((1, NOC), lambda i: (0, 0)),              #      VMEM-resident
            pl.BlockSpec((NOC, out_pad), lambda i: (0, 0)),
        ],
        out_specs=pl.BlockSpec((TB, out_pad), lambda i: (i, 0)),
        compiler_params=pltpu.CompilerParams(
            dimension_semantics=("parallel",),                     # megacore sharding
            vmem_limit_bytes=vmem_limit,
        ),
    )(xb, w_cat_b, b_cat, limits, w_lin_p)
    return out[:B, :out_dim]


def reference_forward(x, conv_ws, conv_bs, w_lin):
    """Pure-JAX reference reproducing the PyTorch forward (eval mode), with the
    same bf16 cast on the conv matmul operands as the kernel (f32 accumulation)."""
    B, L, _ = x.shape
    xb = x.astype(jnp.bfloat16)
    feats = []
    for (W, b, f) in zip(conv_ws, conv_bs, FILTERS):
        T = L - f + 1
        Wb = W.astype(jnp.bfloat16)
        conv = jnp.zeros((B, T, W.shape[-1]), jnp.float32)
        for k in range(f):
            conv = conv + jnp.einsum('btd,do->bto', xb[:, k:k + T, :], Wb[k],
                                     preferred_element_type=jnp.float32)
        conv = jax.nn.relu(conv + b[None, :, :])
        feats.append(jnp.max(conv, axis=1))
    feat = jnp.concatenate(feats, axis=-1)
    logits = feat @ w_lin
    y = jnp.where(logits >= 0.0, logits, NEG_SLOPE * logits)
    return jax.nn.sigmoid(y)


if __name__ == "__main__":
    # Small shapes consistent with the module's forward.
    B, L, D = 2, 8, 32           # batch, seq_len, input_dim
    OC = 8                       # output_channel
    OUT_DIM = 4                  # output_dim
    # dropout=0.5 in the module; identity at inference.

    key = jax.random.PRNGKey(0)
    keys = jax.random.split(key, 2 * len(FILTERS) + 2)

    x = jax.random.normal(keys[0], (B, L, D), jnp.float32)

    conv_ws, conv_bs = [], []
    for i, f in enumerate(FILTERS):
        # PyTorch Conv2d weight is (OC, 1, f, D); stored here as (f, D, OC).
        w = jax.random.normal(keys[1 + 2 * i], (f, D, OC), jnp.float32) * 0.1
        b = jax.random.normal(keys[2 + 2 * i], (1, OC), jnp.float32) * 0.1
        conv_ws.append(w)
        conv_bs.append(b)

    # PyTorch Linear(linear_dim, OUT_DIM, bias=False) weight is (OUT_DIM, linear_dim);
    # stored transposed as (linear_dim, OUT_DIM) so the kernel does feat @ W.
    linear_dim = OC * len(FILTERS)
    w_lin = jax.random.normal(keys[-1], (linear_dim, OUT_DIM), jnp.float32) * 0.1

    out = cnn_classifier(x, conv_ws, conv_bs, w_lin)
    out = jax.block_until_ready(out)

    ref = reference_forward(x, conv_ws, conv_bs, w_lin)
    assert out.shape == (B, OUT_DIM)
    assert jnp.allclose(out, ref, rtol=2e-5, atol=2e-5), (out, ref)

    print("KERNEL_OK")
</pallas_src>

<mosaic_0001>
module attributes {stable_mosaic.version = 11 : i64} {
  func.func @kernel(%arg0: i32, %arg1: memref<2x12x32xbf16, #tpu.memory_space<vmem>>, %arg2: memref<5x32x24xbf16, #tpu.memory_space<vmem>>, %arg3: memref<1x24xf32, #tpu.memory_space<vmem>>, %arg4: memref<1x24xi32, #tpu.memory_space<vmem>>, %arg5: memref<24x128xf32, #tpu.memory_space<vmem>>, %arg6: memref<2x128xf32, #tpu.memory_space<vmem>>) attributes {dimension_semantics = [#tpu.dimension_semantics<parallel>], iteration_bounds = array<i64: 1>, scalar_prefetch = 0 : i64, scratch_operands = 0 : i64, tpu.core_type = #tpu.core_type<tc>, window_params = [{transform_indices = @transform_0, window_bounds = array<i64: 2, 12, 32>}, {pipeline_mode = #tpu.pipeline_mode<synchronous>, transform_indices = @transform_1, window_bounds = array<i64: 5, 32, 24>}, {pipeline_mode = #tpu.pipeline_mode<synchronous>, transform_indices = @transform_2, window_bounds = array<i64: 1, 24>}, {pipeline_mode = #tpu.pipeline_mode<synchronous>, transform_indices = @transform_3, window_bounds = array<i64: 1, 24>}, {pipeline_mode = #tpu.pipeline_mode<synchronous>, transform_indices = @transform_4, window_bounds = array<i64: 24, 128>}, {transform_indices = @transform_5, window_bounds = array<i64: 2, 128>}]} {
    %c0 = arith.constant 0 : index
    %c0_0 = arith.constant 0 : index
    %0 = vector.load %arg4[%c0, %c0_0] : memref<1x24xi32, #tpu.memory_space<vmem>>, vector<1x24xi32>
    %1 = tpu.iota {dimensions = array<i32: 0>} : vector<8x24xi32>
    %cst = arith.constant 0xFF800000 : f32
    %2 = vector.broadcast %cst : f32 to vector<2x24xf32>
    %cst_1 = arith.constant 0.000000e+00 : f32
    %3 = vector.broadcast %cst_1 : f32 to vector<16x24xf32>
    %c0_2 = arith.constant 0 : index
    %c0_3 = arith.constant 0 : index
    %c0_4 = arith.constant 0 : index
    %4 = vector.load %arg1[%c0_2, %c0_3, %c0_4] : memref<2x12x32xbf16, #tpu.memory_space<vmem>>, vector<2x8x32xbf16>
    %5 = vector.shape_cast %4 : vector<2x8x32xbf16> to vector<16x32xbf16>
    %c0_5 = arith.constant 0 : index
    %c0_6 = arith.constant 0 : index
    %c0_7 = arith.constant 0 : index
    %6 = vector.load %arg2[%c0_5, %c0_6, %c0_7] : memref<5x32x24xbf16, #tpu.memory_space<vmem>>, vector<1x32x24xbf16>
    %7 = vector.shape_cast %6 : vector<1x32x24xbf16> to vector<32x24xbf16>
    %cst_8 = arith.constant dense<0.000000e+00> : vector<16x24xf32>
    %8 = tpu.matmul %5, %7, %cst_8 {dimension_numbers = #tpu.dot_dimension_numbers<[1], [0], [0], [1], [0, 0, 1, 1], [], []>} : vector<16x32xbf16>, vector<32x24xbf16>, vector<16x24xf32> -> vector<16x24xf32>
    %9 = arith.addf %3, %8 : vector<16x24xf32>
    %c0_9 = arith.constant 0 : index
    %c1 = arith.constant 1 : index
    %c0_10 = arith.constant 0 : index
    %10 = vector.load %arg1[%c0_9, %c1, %c0_10] : memref<2x12x32xbf16, #tpu.memory_space<vmem>>, vector<2x8x32xbf16>
    %11 = vector.shape_cast %10 : vector<2x8x32xbf16> to vector<16x32xbf16>
    %c1_11 = arith.constant 1 : index
    %c0_12 = arith.constant 0 : index
    %c0_13 = arith.constant 0 : index
    %12 = vector.load %arg2[%c1_11, %c0_12, %c0_13] : memref<5x32x24xbf16, #tpu.memory_space<vmem>>, vector<1x32x24xbf16>
    %13 = vector.shape_cast %12 : vector<1x32x24xbf16> to vector<32x24xbf16>
    %cst_14 = arith.constant dense<0.000000e+00> : vector<16x24xf32>
    %14 = tpu.matmul %11, %13, %cst_14 {dimension_numbers = #tpu.dot_dimension_numbers<[1], [0], [0], [1], [0, 0, 1, 1], [], []>} : vector<16x32xbf16>, vector<32x24xbf16>, vector<16x24xf32> -> vector<16x24xf32>
    %15 = arith.addf %9, %14 : vector<16x24xf32>
    %c0_15 = arith.constant 0 : index
    %c2 = arith.constant 2 : index
    %c0_16 = arith.constant 0 : index
    %16 = vector.load %arg1[%c0_15, %c2, %c0_16] : memref<2x12x32xbf16, #tpu.memory_space<vmem>>, vector<2x8x32xbf16>
    %17 = vector.shape_cast %16 : vector<2x8x32xbf16> to vector<16x32xbf16>
    %c2_17 = arith.constant 2 : index
    %c0_18 = arith.constant 0 : index
    %c0_19 = arith.constant 0 : index
    %18 = vector.load %arg2[%c2_17, %c0_18, %c0_19] : memref<5x32x24xbf16, #tpu.memory_space<vmem>>, vector<1x32x24xbf16>
    %19 = vector.shape_cast %18 : vector<1x32x24xbf16> to vector<32x24xbf16>
    %cst_20 = arith.constant dense<0.000000e+00> : vector<16x24xf32>
    %20 = tpu.matmul %17, %19, %cst_20 {dimension_numbers = #tpu.dot_dimension_numbers<[1], [0], [0], [1], [0, 0, 1, 1], [], []>} : vector<16x32xbf16>, vector<32x24xbf16>, vector<16x24xf32> -> vector<16x24xf32>
    %21 = arith.addf %15, %20 : vector<16x24xf32>
    %c0_21 = arith.constant 0 : index
    %c3 = arith.constant 3 : index
    %c0_22 = arith.constant 0 : index
    %22 = vector.load %arg1[%c0_21, %c3, %c0_22] : memref<2x12x32xbf16, #tpu.memory_space<vmem>>, vector<2x8x32xbf16>
    %23 = vector.shape_cast %22 : vector<2x8x32xbf16> to vector<16x32xbf16>
    %c3_23 = arith.constant 3 : index
    %c0_24 = arith.constant 0 : index
    %c0_25 = arith.constant 0 : index
    %24 = vector.load %arg2[%c3_23, %c0_24, %c0_25] : memref<5x32x24xbf16, #tpu.memory_space<vmem>>, vector<1x32x24xbf16>
    %25 = vector.shape_cast %24 : vector<1x32x24xbf16> to vector<32x24xbf16>
    %cst_26 = arith.constant dense<0.000000e+00> : vector<16x24xf32>
    %26 = tpu.matmul %23, %25, %cst_26 {dimension_numbers = #tpu.dot_dimension_numbers<[1], [0], [0], [1], [0, 0, 1, 1], [], []>} : vector<16x32xbf16>, vector<32x24xbf16>, vector<16x24xf32> -> vector<16x24xf32>
    %27 = arith.addf %21, %26 : vector<16x24xf32>
    %c0_27 = arith.constant 0 : index
    %c4 = arith.constant 4 : index
    %c0_28 = arith.constant 0 : index
    %28 = vector.load %arg1[%c0_27, %c4, %c0_28] : memref<2x12x32xbf16, #tpu.memory_space<vmem>>, vector<2x8x32xbf16>
    %29 = vector.shape_cast %28 : vector<2x8x32xbf16> to vector<16x32xbf16>
    %c4_29 = arith.constant 4 : index
    %c0_30 = arith.constant 0 : index
    %c0_31 = arith.constant 0 : index
    %30 = vector.load %arg2[%c4_29, %c0_30, %c0_31] : memref<5x32x24xbf16, #tpu.memory_space<vmem>>, vector<1x32x24xbf16>
    %31 = vector.shape_cast %30 : vector<1x32x24xbf16> to vector<32x24xbf16>
    %cst_32 = arith.constant dense<0.000000e+00> : vector<16x24xf32>
    %32 = tpu.matmul %29, %31, %cst_32 {dimension_numbers = #tpu.dot_dimension_numbers<[1], [0], [0], [1], [0, 0, 1, 1], [], []>} : vector<16x32xbf16>, vector<32x24xbf16>, vector<16x24xf32> -> vector<16x24xf32>
    %33 = arith.addf %27, %32 : vector<16x24xf32>
    %34 = vector.shape_cast %33 : vector<16x24xf32> to vector<2x8x24xf32>
    %c0_i32 = arith.constant 0 : i32
    %35 = vector.broadcast %c0_i32 : i32 to vector<8x24xi32>
    %36 = arith.addi %1, %35 : vector<8x24xi32>
    %37 = vector.broadcast %0 : vector<1x24xi32> to vector<8x24xi32>
    %38 = arith.cmpi slt, %36, %37 : vector<8x24xi32>
    %39 = vector.shape_cast %38 : vector<8x24xi1> to vector<1x8x24xi1>
    %cst_33 = arith.constant 0xFF800000 : f32
    %40 = vector.shape_cast %39 : vector<1x8x24xi1> to vector<1x8x24xi1>
    %41 = vector.broadcast %40 : vector<1x8x24xi1> to vector<2x8x24xi1>
    %42 = vector.broadcast %cst_33 : f32 to vector<2x8x24xf32>
    %43 = arith.select %41, %34, %42 : vector<2x8x24xi1>, vector<2x8x24xf32>
    %cst_34 = arith.constant dense<0xFF800000> : vector<2x24xf32>
    %44 = vector.multi_reduction <maximumf>, %43, %cst_34 [1] : vector<2x8x24xf32> to vector<2x24xf32>
    %45 = arith.maximumf %2, %44 : vector<2x24xf32>
    %c0_35 = arith.constant 0 : index
    %c0_36 = arith.constant 0 : index
    %46 = vector.load %arg3[%c0_35, %c0_36] : memref<1x24xf32, #tpu.memory_space<vmem>>, vector<1x24xf32>
    %47 = vector.broadcast %46 : vector<1x24xf32> to vector<2x24xf32>
    %48 = arith.addf %45, %47 : vector<2x24xf32>
    %cst_37 = arith.constant 0.000000e+00 : f32
    %49 = vector.broadcast %cst_37 : f32 to vector<2x24xf32>
    %50 = arith.maximumf %48, %49 : vector<2x24xf32>
    %c0_38 = arith.constant 0 : index
    %c0_39 = arith.constant 0 : index
    %51 = vector.load %arg5[%c0_38, %c0_39] : memref<24x128xf32, #tpu.memory_space<vmem>>, vector<24x128xf32>
    %cst_40 = arith.constant dense<0.000000e+00> : vector<2x128xf32>
    %52 = tpu.matmul %50, %51, %cst_40 {dimension_numbers = #tpu.dot_dimension_numbers<[1], [0], [0], [1], [0, 0, 1, 1], [], []>} : vector<2x24xf32>, vector<24x128xf32>, vector<2x128xf32> -> vector<2x128xf32>
    %cst_41 = arith.constant 0.000000e+00 : f32
    %53 = vector.broadcast %cst_41 : f32 to vector<2x128xf32>
    %54 = arith.cmpf oge, %52, %53 : vector<2x128xf32>
    %cst_42 = arith.constant 1.000000e-01 : f32
    %55 = vector.broadcast %cst_42 : f32 to vector<2x128xf32>
    %56 = arith.mulf %55, %52 : vector<2x128xf32>
    %57 = arith.select %54, %52, %56 : vector<2x128xi1>, vector<2x128xf32>
    %58 = arith.negf %57 : vector<2x128xf32>
    %59 = math.exp %58 : vector<2x128xf32>
    %cst_43 = arith.constant 1.000000e+00 : f32
    %60 = vector.broadcast %cst_43 : f32 to vector<2x128xf32>
    %61 = arith.addf %60, %59 : vector<2x128xf32>
    %62 = arith.divf %60, %61 : vector<2x128xf32>
    %c0_44 = arith.constant 0 : index
    %c0_45 = arith.constant 0 : index
    %63 = vector.load %arg6[%c0_44, %c0_45] : memref<2x128xf32, #tpu.memory_space<vmem>>, vector<2x128xf32>
    tpu.vector_store %arg6[%c0_44, %c0_45], %62 {strides = array<i32>} : memref<2x128xf32, #tpu.memory_space<vmem>>, vector<2x128xf32>,
    return
  }
  func.func @transform_0(%arg0: i32) -> (i32, i32, i32) {
    %c0_i32 = arith.constant 0 : i32
    %c0_i32_0 = arith.constant 0 : i32
    %c0_i32_1 = arith.constant 0 : i32
    return %arg0, %c0_i32, %c0_i32_0 : i32, i32, i32
  }
  func.func @transform_1(%arg0: i32) -> (i32, i32, i32) {
    %c0_i32 = arith.constant 0 : i32
    %c0_i32_0 = arith.constant 0 : i32
    %c0_i32_1 = arith.constant 0 : i32
    %c0_i32_2 = arith.constant 0 : i32
    return %c0_i32, %c0_i32_0, %c0_i32_1 : i32, i32, i32
  }
  func.func @transform_2(%arg0: i32) -> (i32, i32) {
    %c0_i32 = arith.constant 0 : i32
    %c0_i32_0 = arith.constant 0 : i32
    %c0_i32_1 = arith.constant 0 : i32
    return %c0_i32, %c0_i32_0 : i32, i32
  }
  func.func @transform_3(%arg0: i32) -> (i32, i32) {
    %c0_i32 = arith.constant 0 : i32
    %c0_i32_0 = arith.constant 0 : i32
    %c0_i32_1 = arith.constant 0 : i32
    return %c0_i32, %c0_i32_0 : i32, i32
  }
  func.func @transform_4(%arg0: i32) -> (i32, i32) {
    %c0_i32 = arith.constant 0 : i32
    %c0_i32_0 = arith.constant 0 : i32
    %c0_i32_1 = arith.constant 0 : i32
    return %c0_i32, %c0_i32_0 : i32, i32
  }
  func.func @transform_5(%arg0: i32) -> (i32, i32) {
    %c0_i32 = arith.constant 0 : i32
    %c0_i32_0 = arith.constant 0 : i32
    return %arg0, %c0_i32 : i32, i32
  }
}

</mosaic_0001>

<llo_original>
// kernel: tpu_custom_call.1
$region0: #{tpu_custom_call.1}
  #allocation0 [shape = 'u32[]', space=smem, size = 0x4, offset = 0x4, fixed_abs, tag = 'smem constant byte address 0x4 - core index']
  #allocation1 [shape = 'u32[144,128]{1,0:T(1,128)}', space=vmem, size = 0x12000, scoped, tag = 'internal scratch']
  %s0 = inlined_call_operand.vmem [shape: bf16[2,12,32], index: 0, kind: input, shape index: {}]
  %s1 = inlined_call_operand.vmem [shape: bf16[5,32,24], index: 1, kind: input, shape index: {}]
  %s2 = inlined_call_operand.vmem [shape: f32[1,24], index: 2, kind: input, shape index: {}]
  %s3 = inlined_call_operand.vmem [shape: s32[1,24], index: 3, kind: input, shape index: {}]
  %s4 = inlined_call_operand.vmem [shape: f32[24,128], index: 4, kind: input, shape index: {}]
  %s5 = inlined_call_operand.hbm [shape: f32[2,128], index: 5, kind: output, shape index: {}]
  %s6 = sld [smem:[#allocation0]]
  $region30: #{tpu_custom_call.1} parent=0
    _
  %s8 = ssub.s32 1, %s6
  %s9 = scalar_select 0, %s8, %s6
  $region1: #{tpu_custom_call.1} parent=0
    #allocation2 [shape = 'u8[1024]{0}', space=vmem, size = 0x400, scoped, tag = 'output window, operand 0, single buffered']
    #allocation3 [shape = 's32[1]{0}', space=sflag, size = 0x4, scoped, tag = 'scoped memory for tpu_custom_call.1']
    %10 = vsyncpa [#allocation3], 0
    // Predicated region
    $region2: #{tpu_custom_call.1} parent=1 // pred_check
      _
    $region3: #{tpu_custom_call.1} parent=1 // pred_check_branch
      %12 = sbr.rel (0) target = $region5
    $region4: #{tpu_custom_call.1} parent=1 // pred_region
      _
    $region5: #{tpu_custom_call.1} parent=1 // pred_fallthru
      _
    // Predicated region
    $region6: #{tpu_custom_call.1} parent=1 // pred_check
      _
    $region7: #{tpu_custom_call.1} parent=1 // pred_check_branch
      %14 = sbr.rel (0) target = $region9
    $region8: #{tpu_custom_call.1} parent=1 // pred_region
      _
    $region9: #{tpu_custom_call.1} parent=1 // pred_fallthru
      _
    // Predicated region
    $region10: #{tpu_custom_call.1} parent=1 // pred_check
      _
    $region11: #{tpu_custom_call.1} parent=1 // pred_check_branch
      %16 = sbr.rel (0) target = $region13
    $region12: #{tpu_custom_call.1} parent=1 // pred_region
      _
    $region13: #{tpu_custom_call.1} parent=1 // pred_fallthru
      _
    // Predicated region
    $region14: #{tpu_custom_call.1} parent=1 // pred_check
      _
    $region15: #{tpu_custom_call.1} parent=1 // pred_check_branch
      %18 = sbr.rel (0) target = $region17
    $region16: #{tpu_custom_call.1} parent=1 // pred_region
      _
    $region17: #{tpu_custom_call.1} parent=1 // pred_fallthru
      _
    // Predicated region
    $region18: #{tpu_custom_call.1} parent=1 // pred_check
      _
    $region19: #{tpu_custom_call.1} parent=1 // pred_check_branch
      %20 = sbr.rel (0) target = $region21
    $region20: #{tpu_custom_call.1} parent=1 // pred_region
      _
    $region21: #{tpu_custom_call.1} parent=1 // pred_fallthru
      _
    %v22 = vld [vmem:[%s3] sm:$0x1]
    %v23 = vlaneseq
    %v24 = vshrl.u32 %v23, 7
    %v25 = vld [vmem:[%s0] sm:$0xf]
    %v26 = vld [vmem:[%s0 + $0x8] sm:$0xf]
    %v27 = vld [vmem:[%s1] sm:$0xf]
    %v28 = vld [vmem:[%s1 + $0x4] sm:$0xf]
    %v29 = vld [vmem:[%s1 + $0x8] sm:$0xf]
    %v30 = vld [vmem:[%s1 + $0xc] sm:$0xf]
    %v31 = vld [vmem:[%s0 + $0x4] sm:$0x1]
    %v32 = vld [vmem:[%s0 + $0xc] sm:$0x1]
    %vm33 = vsmask.f32 3328
    %vm34 = vsmask.f32 7440
    %vm35 = vmor %vm33, %vm34
    %v37 = vshrl.u32 %v25, 16
    %v39 = vrot.slane %v37, 4
    %v40 = vshll.u32 %v25, 16
    %v42 = vrot.slane %v40, 5
    %v43 = vor.u32 %v39, %v42
    %v44 = vrot.slane %v43, 4
    %v46 = vshll.u32 %v31, 16
    %v48 = vrot.slane %v46, 5
    %v49 = vsel %vm35, %v44, %v48
    %v51 = vshrl.u32 %v26, 16
    %v53 = vrot.slane %v51, 4
    %v54 = vshll.u32 %v26, 16
    %v56 = vrot.slane %v54, 5
    %v57 = vor.u32 %v53, %v56
    %v58 = vrot.slane %v57, 4
    %v60 = vshll.u32 %v32, 16
    %v62 = vrot.slane %v60, 5
    %v63 = vsel %vm35, %v58, %v62
    %s64 = scalar_lea.vmem %s1, 16
    %v65 = vld [vmem:[%s64] sm:$0xf]
    %v66 = vld [vmem:[%s64 + $0x4] sm:$0xf]
    %v67 = vld [vmem:[%s64 + $0x8] sm:$0xf]
    %v68 = vld [vmem:[%s64 + $0xc] sm:$0xf]
    %v69 = vunpack.c.l.b16 %v49
    %v70 = vunpack.c.l.b16 %v63
    %v71 = vpack.c.b16 %v70, %v69
    %v76 = vunpack.c.l.b16 %v65
    %v77 = vunpack.c.l.b16 %v66
    %v78 = vunpack.c.l.b16 %v67
    %v79 = vunpack.c.l.b16 %v68
    %v80 = vpack.c.b16 %v77, %v76
    %v81 = vpack.c.b16 %v79, %v78
    %vm84 = vcmask 261120
    %v86 = vsel %vm84, %v71, 0
    %88 = vmatprep.subr.bf16.mxu0 0
    %89 = vmatpush1.bf16.msra.mxu0 %v80
    %90 = vmatprep.subr.bf16.mxu0 0
    %91 = vmatpush1.bf16.msra.mxu0 %v81
    %92 = vmatprep.subr.bf16.mxu0 0
    %93 = vmatpush1.bf16.msra.mxu0 0
    %94 = vmatprep.subr.bf16.mxu0 0
    %95 = vmatpush1.bf16.msra.mxu0 0
    %96 = vmatprep.subr.bf16.mxu0 0
    %97 = vmatpush1.bf16.msra.mxu0 0
    %98 = vmatprep.subr.bf16.mxu0 0
    %99 = vmatpush1.bf16.msra.mxu0 0
    %100 = vmatprep.subr.bf16.mxu0 0
    %101 = vmatpush1.bf16.msra.mxu0 0
    %102 = vmatprep.subr.bf16.mxu0 0
    %103 = vmatpush1.bf16.msra.mxu0 0
    %104 = vmatprep.subr.bf16.mxu0 0
    %105 = vmatpush1.bf16.msra.mxu0 0
    %106 = vmatprep.subr.bf16.mxu0 0
    %107 = vmatpush1.bf16.msra.mxu0 0
    %108 = vmatprep.subr.bf16.mxu0 0
    %109 = vmatpush1.bf16.msra.mxu0 0
    %110 = vmatprep.subr.bf16.mxu0 0
    %111 = vmatpush1.bf16.msra.mxu0 0
    %112 = vmatprep.subr.bf16.mxu0 0
    %113 = vmatpush1.bf16.msra.mxu0 0
    %114 = vmatprep.subr.bf16.mxu0 0
    %115 = vmatpush1.bf16.msra.mxu0 0
    %116 = vmatprep.subr.bf16.mxu0 0
    %117 = vmatpush1.bf16.msra.mxu0 0
    %118 = vmatprep.subr.bf16.mxu0 0
    %119 = vmatpush1.bf16.msra.mxu0 0
    %120 = vmatprep.mubr.bf16.mxu0 0
    %121 = vmatmul.mubr.bf16.gmra.mrb[0].mxu0 %v86
    %v122 = vpop.f32.mrb[0].mxu0
    %v123 = vadd.f32 0.0, %v122
    %v124 = vpop.f32.mrb[0].mxu0
    %v125 = vpop.f32.mrb[0].mxu0
    %v126 = vadd.f32 0.0, %v125
    %v127 = vpop.f32.mrb[0].mxu0
    %128 = vdwg.mxu0
    %v131 = vunpack.c.l.b16 %v25
    %v132 = vunpack.c.l.b16 %v26
    %v133 = vpack.c.b16 %v132, %v131
    %v138 = vunpack.c.l.b16 %v27
    %v139 = vunpack.c.l.b16 %v28
    %v140 = vunpack.c.l.b16 %v29
    %v141 = vunpack.c.l.b16 %v30
    %v142 = vpack.c.b16 %v139, %v138
    %v143 = vpack.c.b16 %v141, %v140
    %v147 = vsel %vm84, %v133, 0
    %149 = vmatprep.subr.bf16.mxu0 0
    %150 = vmatpush1.bf16.msra.mxu0 %v142
    %151 = vmatprep.subr.bf16.mxu0 0
    %152 = vmatpush1.bf16.msra.mxu0 %v143
    %153 = vmatprep.subr.bf16.mxu0 0
    %154 = vmatpush1.bf16.msra.mxu0 0
    %155 = vmatprep.subr.bf16.mxu0 0
    %156 = vmatpush1.bf16.msra.mxu0 0
    %157 = vmatprep.subr.bf16.mxu0 0
    %158 = vmatpush1.bf16.msra.mxu0 0
    %159 = vmatprep.subr.bf16.mxu0 0
    %160 = vmatpush1.bf16.msra.mxu0 0
    %161 = vmatprep.subr.bf16.mxu0 0
    %162 = vmatpush1.bf16.msra.mxu0 0
    %163 = vmatprep.subr.bf16.mxu0 0
    %164 = vmatpush1.bf16.msra.mxu0 0
    %165 = vmatprep.subr.bf16.mxu0 0
    %166 = vmatpush1.bf16.msra.mxu0 0
    %167 = vmatprep.subr.bf16.mxu0 0
    %168 = vmatpush1.bf16.msra.mxu0 0
    %169 = vmatprep.subr.bf16.mxu0 0
    %170 = vmatpush1.bf16.msra.mxu0 0
    %171 = vmatprep.subr.bf16.mxu0 0
    %172 = vmatpush1.bf16.msra.mxu0 0
    %173 = vmatprep.subr.bf16.mxu0 0
    %174 = vmatpush1.bf16.msra.mxu0 0
    %175 = vmatprep.subr.bf16.mxu0 0
    %176 = vmatpush1.bf16.msra.mxu0 0
    %177 = vmatprep.subr.bf16.mxu0 0
    %178 = vmatpush1.bf16.msra.mxu0 0
    %179 = vmatprep.subr.bf16.mxu0 0
    %180 = vmatpush1.bf16.msra.mxu0 0
    %181 = vmatprep.mubr.bf16.mxu0 0
    %182 = vmatmul.mubr.bf16.gmra.mrb[0].mxu0 %v147
    %v183 = vpop.f32.mrb[0].mxu0
    %v184 = vadd.f32 %v123, %v183
    %v185 = vpop.f32.mrb[0].mxu0
    %v186 = vpop.f32.mrb[0].mxu0
    %v187 = vadd.f32 %v126, %v186
    %v188 = vpop.f32.mrb[0].mxu0
    %189 = vdwg.mxu0
    %v190 = vld [vmem:[%s0] sm:$0xe]
    %v191 = vld [vmem:[%s0 + $0x8] sm:$0xe]
    %vm196 = vcmask 1042432
    %vm197 = vcmask 1046532
    %vm198 = vmor %vm196, %vm197
    %v199 = vrot.slane %v190, 5
    %v200 = vrot.slane %v199, 4
    %v201 = vrot.slane %v31, 5
    %v202 = vsel %vm198, %v200, %v201
    %v203 = vrot.slane %v191, 5
    %v204 = vrot.slane %v203, 4
    %v205 = vrot.slane %v32, 5
    %v206 = vsel %vm198, %v204, %v205
    %s207 = scalar_lea.vmem %s1, 32
    %v208 = vld [vmem:[%s207] sm:$0xf]
    %v209 = vld [vmem:[%s207 + $0x4] sm:$0xf]
    %v210 = vld [vmem:[%s207 + $0x8] sm:$0xf]
    %v211 = vld [vmem:[%s207 + $0xc] sm:$0xf]
    %v212 = vunpack.c.l.b16 %v202
    %v213 = vunpack.c.l.b16 %v206
    %v214 = vpack.c.b16 %v213, %v212
    %v219 = vunpack.c.l.b16 %v208
    %v220 = vunpack.c.l.b16 %v209
    %v221 = vunpack.c.l.b16 %v210
    %v222 = vunpack.c.l.b16 %v211
    %v223 = vpack.c.b16 %v220, %v219
    %v224 = vpack.c.b16 %v222, %v221
    %v228 = vsel %vm84, %v214, 0
    %230 = vmatprep.subr.bf16.mxu0 0
    %231 = vmatpush1.bf16.msra.mxu0 %v223
    %232 = vmatprep.subr.bf16.mxu0 0
    %233 = vmatpush1.bf16.msra.mxu0 %v224
    %234 = vmatprep.subr.bf16.mxu0 0
    %235 = vmatpush1.bf16.msra.mxu0 0
    %236 = vmatprep.subr.bf16.mxu0 0
    %237 = vmatpush1.bf16.msra.mxu0 0
    %238 = vmatprep.subr.bf16.mxu0 0
    %239 = vmatpush1.bf16.msra.mxu0 0
    %240 = vmatprep.subr.bf16.mxu0 0
    %241 = vmatpush1.bf16.msra.mxu0 0
    %242 = vmatprep.subr.bf16.mxu0 0
    %243 = vmatpush1.bf16.msra.mxu0 0
    %244 = vmatprep.subr.bf16.mxu0 0
    %245 = vmatpush1.bf16.msra.mxu0 0
    %246 = vmatprep.subr.bf16.mxu0 0
    %247 = vmatpush1.bf16.msra.mxu0 0
    %248 = vmatprep.subr.bf16.mxu0 0
    %249 = vmatpush1.bf16.msra.mxu0 0
    %250 = vmatprep.subr.bf16.mxu0 0
    %251 = vmatpush1.bf16.msra.mxu0 0
    %252 = vmatprep.subr.bf16.mxu0 0
    %253 = vmatpush1.bf16.msra.mxu0 0
    %254 = vmatprep.subr.bf16.mxu0 0
    %255 = vmatpush1.bf16.msra.mxu0 0
    %256 = vmatprep.subr.bf16.mxu0 0
    %257 = vmatpush1.bf16.msra.mxu0 0
    %258 = vmatprep.subr.bf16.mxu0 0
    %259 = vmatpush1.bf16.msra.mxu0 0
    %260 = vmatprep.subr.bf16.mxu0 0
    %261 = vmatpush1.bf16.msra.mxu0 0
    %262 = vmatprep.mubr.bf16.mxu0 0
    %263 = vmatmul.mubr.bf16.gmra.mrb[0].mxu0 %v228
    %v264 = vpop.f32.mrb[0].mxu0
    %v265 = vadd.f32 0.0, %v264
    %v266 = vpop.f32.mrb[0].mxu0
    %v267 = vpop.f32.mrb[0].mxu0
    %v268 = vadd.f32 0.0, %v267
    %v269 = vpop.f32.mrb[0].mxu0
    %270 = vdwg.mxu0
    %v271 = vadd.f32 %v184, %v265
    %v272 = vadd.f32 %v187, %v268
    %v273 = vld [vmem:[%s0 + $0x4] sm:$0x3]
    %v274 = vld [vmem:[%s0 + $0xc] sm:$0x3]
    %vm275 = vsmask.f32 2304
    %vm276 = vsmask.f32 6416
    %vm277 = vmor %vm275, %vm276
    %v279 = vshrl.u32 %v190, 16
    %v281 = vrot.slane %v279, 5
    %v282 = vshll.u32 %v190, 16
    %v284 = vrot.slane %v282, 6
    %v285 = vor.u32 %v281, %v284
    %v286 = vrot.slane %v285, 4
    %v288 = vshrl.u32 %v273, 16
    %v290 = vrot.slane %v288, 5
    %v291 = vshll.u32 %v273, 16
    %v293 = vrot.slane %v291, 6
    %v294 = vor.u32 %v290, %v293
    %v295 = vsel %vm277, %v286, %v294
    %v297 = vshrl.u32 %v191, 16
    %v299 = vrot.slane %v297, 5
    %v300 = vshll.u32 %v191, 16
    %v302 = vrot.slane %v300, 6
    %v303 = vor.u32 %v299, %v302
    %v304 = vrot.slane %v303, 4
    %v306 = vshrl.u32 %v274, 16
    %v308 = vrot.slane %v306, 5
    %v309 = vshll.u32 %v274, 16
    %v311 = vrot.slane %v309, 6
    %v312 = vor.u32 %v308, %v311
    %v313 = vsel %vm277, %v304, %v312
    %s314 = scalar_lea.vmem %s1, 48
    %v315 = vld [vmem:[%s314] sm:$0xf]
    %v316 = vld [vmem:[%s314 + $0x4] sm:$0xf]
    %v317 = vld [vmem:[%s314 + $0x8] sm:$0xf]
    %v318 = vld [vmem:[%s314 + $0xc] sm:$0xf]
    %v319 = vunpack.c.l.b16 %v295
    %v320 = vunpack.c.l.b16 %v313
    %v321 = vpack.c.b16 %v320, %v319
    %v326 = vunpack.c.l.b16 %v315
    %v327 = vunpack.c.l.b16 %v316
    %v328 = vunpack.c.l.b16 %v317
    %v329 = vunpack.c.l.b16 %v318
    %v330 = vpack.c.b16 %v327, %v326
    %v331 = vpack.c.b16 %v329, %v328
    %v335 = vsel %vm84, %v321, 0
    %337 = vmatprep.subr.bf16.mxu0 0
    %338 = vmatpush1.bf16.msra.mxu0 %v330
    %339 = vmatprep.subr.bf16.mxu0 0
    %340 = vmatpush1.bf16.msra.mxu0 %v331
    %341 = vmatprep.subr.bf16.mxu0 0
    %342 = vmatpush1.bf16.msra.mxu0 0
    %343 = vmatprep.subr.bf16.mxu0 0
    %344 = vmatpush1.bf16.msra.mxu0 0
    %345 = vmatprep.subr.bf16.mxu0 0
    %346 = vmatpush1.bf16.msra.mxu0 0
    %347 = vmatprep.subr.bf16.mxu0 0
    %348 = vmatpush1.bf16.msra.mxu0 0
    %349 = vmatprep.subr.bf16.mxu0 0
    %350 = vmatpush1.bf16.msra.mxu0 0
    %351 = vmatprep.subr.bf16.mxu0 0
    %352 = vmatpush1.bf16.msra.mxu0 0
    %353 = vmatprep.subr.bf16.mxu0 0
    %354 = vmatpush1.bf16.msra.mxu0 0
    %355 = vmatprep.subr.bf16.mxu0 0
    %356 = vmatpush1.bf16.msra.mxu0 0
    %357 = vmatprep.subr.bf16.mxu0 0
    %358 = vmatpush1.bf16.msra.mxu0 0
    %359 = vmatprep.subr.bf16.mxu0 0
    %360 = vmatpush1.bf16.msra.mxu0 0
    %361 = vmatprep.subr.bf16.mxu0 0
    %362 = vmatpush1.bf16.msra.mxu0 0
    %363 = vmatprep.subr.bf16.mxu0 0
    %364 = vmatpush1.bf16.msra.mxu0 0
    %365 = vmatprep.subr.bf16.mxu0 0
    %366 = vmatpush1.bf16.msra.mxu0 0
    %367 = vmatprep.subr.bf16.mxu0 0
    %368 = vmatpush1.bf16.msra.mxu0 0
    %369 = vmatprep.mubr.bf16.mxu0 0
    %370 = vmatmul.mubr.bf16.gmra.mrb[0].mxu0 %v335
    %v371 = vpop.f32.mrb[0].mxu0
    %v372 = vadd.f32 0.0, %v371
    %v373 = vpop.f32.mrb[0].mxu0
    %v374 = vpop.f32.mrb[0].mxu0
    %v375 = vadd.f32 0.0, %v374
    %v376 = vpop.f32.mrb[0].mxu0
    %377 = vdwg.mxu0
    %v378 = vadd.f32 %v271, %v372
    %v379 = vadd.f32 %v272, %v375
    %v380 = vld [vmem:[%s0] sm:$0xc]
    %v381 = vld [vmem:[%s0 + $0x8] sm:$0xc]
    %vm386 = vcmask 1041408
    %vm387 = vcmask 1045508
    %vm388 = vmor %vm386, %vm387
    %v389 = vrot.slane %v380, 6
    %v390 = vrot.slane %v389, 4
    %v391 = vrot.slane %v273, 6
    %v392 = vsel %vm388, %v390, %v391
    %v393 = vrot.slane %v381, 6
    %v394 = vrot.slane %v393, 4
    %v395 = vrot.slane %v274, 6
    %v396 = vsel %vm388, %v394, %v395
    %s397 = scalar_lea.vmem %s1, 64
    %v398 = vld [vmem:[%s397] sm:$0xf]
    %v399 = vld [vmem:[%s397 + $0x4] sm:$0xf]
    %v400 = vld [vmem:[%s397 + $0x8] sm:$0xf]
    %v401 = vld [vmem:[%s397 + $0xc] sm:$0xf]
    %v402 = vunpack.c.l.b16 %v392
    %v403 = vunpack.c.l.b16 %v396
    %v404 = vpack.c.b16 %v403, %v402
    %v409 = vunpack.c.l.b16 %v398
    %v410 = vunpack.c.l.b16 %v399
    %v411 = vunpack.c.l.b16 %v400
    %v412 = vunpack.c.l.b16 %v401
    %v413 = vpack.c.b16 %v410, %v409
    %v414 = vpack.c.b16 %v412, %v411
    %v418 = vsel %vm84, %v404, 0
    %420 = vmatprep.subr.bf16.mxu0 0
    %421 = vmatpush1.bf16.msra.mxu0 %v413
    %422 = vmatprep.subr.bf16.mxu0 0
    %423 = vmatpush1.bf16.msra.mxu0 %v414
    %424 = vmatprep.subr.bf16.mxu0 0
    %425 = vmatpush1.bf16.msra.mxu0 0
    %426 = vmatprep.subr.bf16.mxu0 0
    %427 = vmatpush1.bf16.msra.mxu0 0
    %428 = vmatprep.subr.bf16.mxu0 0
    %429 = vmatpush1.bf16.msra.mxu0 0
    %430 = vmatprep.subr.bf16.mxu0 0
    %431 = vmatpush1.bf16.msra.mxu0 0
    %432 = vmatprep.subr.bf16.mxu0 0
    %433 = vmatpush1.bf16.msra.mxu0 0
    %434 = vmatprep.subr.bf16.mxu0 0
    %435 = vmatpush1.bf16.msra.mxu0 0
    %436 = vmatprep.subr.bf16.mxu0 0
    %437 = vmatpush1.bf16.msra.mxu0 0
    %438 = vmatprep.subr.bf16.mxu0 0
    %439 = vmatpush1.bf16.msra.mxu0 0
    %440 = vmatprep.subr.bf16.mxu0 0
    %441 = vmatpush1.bf16.msra.mxu0 0
    %442 = vmatprep.subr.bf16.mxu0 0
    %443 = vmatpush1.bf16.msra.mxu0 0
    %444 = vmatprep.subr.bf16.mxu0 0
    %445 = vmatpush1.bf16.msra.mxu0 0
    %446 = vmatprep.subr.bf16.mxu0 0
    %447 = vmatpush1.bf16.msra.mxu0 0
    %448 = vmatprep.subr.bf16.mxu0 0
    %449 = vmatpush1.bf16.msra.mxu0 0
    %450 = vmatprep.subr.bf16.mxu0 0
    %451 = vmatpush1.bf16.msra.mxu0 0
    %452 = vmatprep.mubr.bf16.mxu0 0
    %453 = vmatmul.mubr.bf16.gmra.mrb[0].mxu0 %v418
    %v454 = vpop.f32.mrb[0].mxu0
    %v455 = vadd.f32 0.0, %v454
    %v456 = vpop.f32.mrb[0].mxu0
    %v457 = vpop.f32.mrb[0].mxu0
    %v458 = vadd.f32 0.0, %v457
    %v459 = vpop.f32.mrb[0].mxu0
    %460 = vdwg.mxu0
    %v461 = vadd.f32 %v378, %v455
    %v462 = vadd.f32 %v379, %v458
    %v463 = vlaneseq
    %v464 = vshrl.u32 %v463, 7
    %v465 = vsub.s32 0, %v464
    %v466 = vrot.slane %v22, %v465
    %vm467 = vcmp.lt.s32.totalorder %v24, %v466
    %v468 = vsel %vm467, 1, 0
    %vm469 = vcmp.eq.s32.totalorder %v468, 1
    %v470 = vsel %vm469, %v461, -inf
    %v471 = vsel %vm469, %v462, -inf
    %vm472 = vcmask 195584
    %v473 = vsel %vm472, %v470, -inf
    %v474 = vrot.slane %v473, 4
    %v475 = vmax.f32 %v473, %v474
    %v476 = vrot.slane %v475, 2
    %v477 = vmax.f32 %v475, %v476
    %v478 = vrot.slane %v477, 1
    %v479 = vmax.f32 %v477, %v478
    %v480 = vsel %vm472, %v471, -inf
    %v481 = vrot.slane %v480, 4
    %v482 = vmax.f32 %v480, %v481
    %v483 = vrot.slane %v482, 2
    %v484 = vmax.f32 %v482, %v483
    %v485 = vrot.slane %v484, 1
    %v486 = vmax.f32 %v484, %v485
    %v487 = vld [vmem:[%s2] sm:$0x1]
    %v489 = vlaneseq
    %v490 = vshrl.u32 %v489, 7
    %v491 = vsub.s32 0, %v490
    %v492 = vrot.slane %v487, %v491
    %v494 = vadd.f32 %v479, %v492
    %v495 = vadd.f32 %v486, %v492
    %v496 = vmax.f32 %v494, 0.0
    %v497 = vmax.f32 %v495, 0.0
    %v498 = vld [vmem:[%s4] sm:$0xff]
    %v499 = vld [vmem:[%s4 + $0x8] sm:$0xff]
    %v500 = vld [vmem:[%s4 + $0x10] sm:$0xff]
    %v503 = vrot.slane %v497, 7
    %vm504 = vcmask 1041409
    %v505 = vsel %vm504, %v503, %v496
    %v506 = vsel %vm472, %v505, 0
    %508 = vmatprep.subr.mxu0 0.0
    %509 = vmatpush1.msra.mxu0 %v498
    %510 = vmatprep.subr.mxu0 0.0
    %511 = vmatpush1.msra.mxu0 %v499
    %512 = vmatprep.subr.mxu0 0.0
    %513 = vmatpush1.msra.mxu0 %v500
    %514 = vmatprep.subr.mxu0 0.0
    %515 = vmatpush1.msra.mxu0 0.0
    %516 = vmatprep.subr.mxu0 0.0
    %517 = vmatpush1.msra.mxu0 0.0
    %518 = vmatprep.subr.mxu0 0.0
    %519 = vmatpush1.msra.mxu0 0.0
    %520 = vmatprep.subr.mxu0 0.0
    %521 = vmatpush1.msra.mxu0 0.0
    %522 = vmatprep.subr.mxu0 0.0
    %523 = vmatpush1.msra.mxu0 0.0
    %524 = vmatprep.subr.mxu0 0.0
    %525 = vmatpush1.msra.mxu0 0.0
    %526 = vmatprep.subr.mxu0 0.0
    %527 = vmatpush1.msra.mxu0 0.0
    %528 = vmatprep.subr.mxu0 0.0
    %529 = vmatpush1.msra.mxu0 0.0
    %530 = vmatprep.subr.mxu0 0.0
    %531 = vmatpush1.msra.mxu0 0.0
    %532 = vmatprep.subr.mxu0 0.0
    %533 = vmatpush1.msra.mxu0 0.0
    %534 = vmatprep.subr.mxu0 0.0
    %535 = vmatpush1.msra.mxu0 0.0
    %536 = vmatprep.subr.mxu0 0.0
    %537 = vmatpush1.msra.mxu0 0.0
    %538 = vmatprep.subr.mxu0 0.0
    %539 = vmatpush1.msra.mxu0 0.0
    %540 = vmatprep.subr.mxu0 0.0
    %541 = vmatpush1.msra.mxu0 0.0
    %542 = vmatprep.subr.mxu0 0.0
    %543 = vmatpush1.msra.mxu0 0.0
    %544 = vmatprep.subr.mxu0 0.0
    %545 = vmatpush1.msra.mxu0 0.0
    %546 = vmatprep.subr.mxu0 0.0
    %547 = vmatpush1.msra.mxu0 0.0
    %548 = vmatprep.subr.mxu0 0.0
    %549 = vmatpush1.msra.mxu0 0.0
    %550 = vmatprep.subr.mxu0 0.0
    %551 = vmatpush1.msra.mxu0 0.0
    %552 = vmatprep.subr.mxu0 0.0
    %553 = vmatpush1.msra.mxu0 0.0
    %554 = vmatprep.subr.mxu0 0.0
    %555 = vmatpush1.msra.mxu0 0.0
    %556 = vmatprep.subr.mxu0 0.0
    %557 = vmatpush1.msra.mxu0 0.0
    %558 = vmatprep.subr.mxu0 0.0
    %559 = vmatpush1.msra.mxu0 0.0
    %560 = vmatprep.subr.mxu0 0.0
    %561 = vmatpush1.msra.mxu0 0.0
    %562 = vmatprep.subr.mxu0 0.0
    %563 = vmatpush1.msra.mxu0 0.0
    %564 = vmatprep.subr.mxu0 0.0
    %565 = vmatpush1.msra.mxu0 0.0
    %566 = vmatprep.subr.mxu0 0.0
    %567 = vmatpush1.msra.mxu0 0.0
    %568 = vmatprep.subr.mxu0 0.0
    %569 = vmatpush1.msra.mxu0 0.0
    %570 = vmatprep.subr.mxu0 0.0
    %571 = vmatpush1.msra.mxu0 0.0
    %572 = vmatprep.mubr.f32.mxu0 0.0
    %573 = vmatmul.mubr.f32.gmra.mrb[0].mxu0 %v506
    %v574 = vpop.f32.mrb[0].mxu0
    %v575 = vadd.f32 0.0, %v574
    %v576 = vpop.f32.mrb[0].mxu0
    %577 = vdwg.mxu0
    %vm578 = vcmp.ge.f32.partialorder %v575, 0.0
    %v579 = vmul.f32 %v575, 0.1
    %v580 = vsel %vm578, %v575, %v579
    %v581 = vxor.u32 %v580, 2147483648
    %v582 = vmul.f32 %v581, 1.442695
    %v583 = vpow.pop %v582
    %v584 = vadd.f32 %v583, 1.0
    %v585 = vrcp.pop %v584
    %v586 = vmul.f32 1.0, %v585
    %587 = vst [vmem:[#allocation2] sm:$0x3] %v586
    // Predicated region
    $region22: #{tpu_custom_call.1} parent=1 // pred_check
      _
    $region23: #{tpu_custom_call.1} parent=1 // pred_check_branch
      %589 = sbr.rel (0) target = $region25
    $region24: #{tpu_custom_call.1} parent=1 // pred_region
      %s591 = ssub.s32 32, 32
      %592 = vsyncadd [#allocation3], %s591
      %s594 = sshll.u32 [#allocation2], 4
      %s595 = int_to_ptr.vmem [resolvable:$true] %s594
      %597 = dma.vmem_to_hbm [thread:$0]  %s595, 32, %s5, [#allocation3]
    $region25: #{tpu_custom_call.1} parent=1 // pred_fallthru
      _
    // Predicated region
    $region26: #{tpu_custom_call.1} parent=1 // pred_check
      _
    $region27: #{tpu_custom_call.1} parent=1 // pred_check_branch
      %599 = sbr.rel (0) target = $region29
    $region28: #{tpu_custom_call.1} parent=1 // pred_region
      %600 = dma.done [#allocation3], 32
    $region29: #{tpu_custom_call.1} parent=1 // pred_fallthru
      _
    %601 = vsyncpa [#allocation3], 1

</llo_original>
